<compile_context>
chip_gen: v7x
topology: tpu7x:2x2x1
jax: 0.10.0
libtpu: 0.0.40
codegen_flags: <defaults>
</compile_context>

<pallas_src>
import jax
import jax.numpy as jnp
from jax import lax
from jax.experimental import pallas as pl
from jax.experimental.pallas import tpu as pltpu

EPS = 1e-5          # InstanceNorm2d default
NEG_SLOPE = 0.1     # LeakyReLU slope


def _deconv_block_kernel(patch_ref, w1_ref, w2_ref, o_ref):
    # patch_ref: (1, CKK, P) bf16   w1_ref: (Cout, CKK) bf16   w2_ref: (Cout, Cout) bf16
    p = patch_ref[0]                                            # (CKK, P)

    # ConvTranspose2d expressed as a channel-major im2col matmul -> (Cout, P), f32 acc.
    y = jnp.dot(w1_ref[...], p, preferred_element_type=jnp.float32)

    # InstanceNorm2d (no affine): per-channel mean/var over the spatial (lane) axis.
    mean = jnp.mean(y, axis=1, keepdims=True)                   # (Cout, 1)
    var = jnp.mean((y - mean) ** 2, axis=1, keepdims=True)      # biased variance
    yn = (y - mean) * lax.rsqrt(var + EPS)

    # LeakyReLU(0.1), kept in f32 (v5e has no bf16 VPU path anyway).
    act = jnp.where(yn >= 0, yn, NEG_SLOPE * yn)

    # Conv2d 1x1 (no bias): z = W2 @ act.  W2 comes pre-oriented (oc, ic), no .T needed.
    z = jnp.dot(w2_ref[...], act.astype(w2_ref.dtype),
                preferred_element_type=jnp.float32)

    o_ref[0] = z.astype(o_ref.dtype)                            # lane-dense store (P last)


def _im2col_for_deconv(x, K, stride, padding, Hout, Wout):
    """Glue: express the transposed conv as stride-1 conv patches, channel-major.

    Returns (N, Cin*K*K, Hout*Wout)."""
    N, Cin, H, W = x.shape
    # 1) dilate (insert stride-1 zeros between pixels)
    Hd, Wd = (H - 1) * stride + 1, (W - 1) * stride + 1
    xd = jnp.zeros((N, Cin, Hd, Wd), x.dtype)
    xd = xd.at[:, :, ::stride, ::stride].set(x)
    # 2) pad by (K - 1 - padding)
    pad = K - 1 - padding
    xp = jnp.pad(xd, ((0, 0), (0, 0), (pad, pad), (pad, pad)))
    # 3) extract KxK patches (stride-1 conv windows)
    slices = []
    for kh in range(K):
        for kw in range(K):
            slices.append(xp[:, :, kh:kh + Hout, kw:kw + Wout])  # (N,Cin,Hout,Wout)
    patches = jnp.stack(slices, axis=2)                  # (N, Cin, K*K, Hout, Wout)
    # Channel-major flatten: index = ic*K*K + kh*K + kw, spatial -> lane axis.
    return patches.reshape(N, Cin * K * K, Hout * Wout)


def deconv_block(x, w_deconv, w_conv1x1, kernel_size, stride, padding, is_norm=True):
    """x: (N, Cin, H, W) NCHW.  w_deconv: (Cin, Cout, K, K) (PyTorch ConvTranspose2d
    layout).  w_conv1x1: (Cout, Cout, 1, 1).  Returns (N, Cout, Hout, Wout), f32."""
    N, Cin, H, W = x.shape
    K = kernel_size
    Cout = w_deconv.shape[1]
    Hout = (H - 1) * stride - 2 * padding + K
    Wout = (W - 1) * stride - 2 * padding + K
    P = Hout * Wout
    CKK = Cin * K * K

    if not is_norm:
        # TODO(synk): is_norm=False variant (skip InstanceNorm) not implemented; the
        # reference module defaults to is_norm=True.
        raise NotImplementedError("is_norm=False variant not implemented")

    # Glue: im2col (channel-major) + reshaping weights for the matmul formulation.
    patches = _im2col_for_deconv(x, K, stride, padding, Hout, Wout)   # (N, CKK, P)
    # Equivalent stride-1 conv uses the spatially-flipped kernel; orient as (Cout, CKK).
    wf = w_deconv[:, :, ::-1, ::-1]                                   # (Cin, Cout, K, K)
    w1 = wf.transpose(1, 0, 2, 3).reshape(Cout, CKK)
    w2 = w_conv1x1.reshape(Cout, Cout)                                # (oc, ic)

    # bf16 matmul operands (f32 accumulation in-kernel) -> ~2x less HBM traffic for the
    # im2col tensor and full-rate MXU on v6e/v7x.
    # TODO(synk): for large images, fuse the window extraction into the kernel (P-tiled,
    # two-pass instance-norm) to remove the im2col HBM amplification entirely.
    patches_bf = patches.astype(jnp.bfloat16)
    w1_bf = w1.astype(jnp.bfloat16)
    w2_bf = w2.astype(jnp.bfloat16)

    cost = pl.CostEstimate(
        flops=int(N * (2 * Cout * CKK * P + 2 * Cout * Cout * P + 8 * Cout * P)),
        transcendentals=int(N * Cout),
        bytes_accessed=int(patches_bf.size * 2 + w1_bf.size * 2 + w2_bf.size * 2
                           + N * Cout * P * 4),
    )

    out = pl.pallas_call(
        _deconv_block_kernel,
        out_shape=jax.ShapeDtypeStruct((N, Cout, P), jnp.float32),
        grid_spec=pltpu.PrefetchScalarGridSpec(
            num_scalar_prefetch=0,
            grid=(N,),
            in_specs=[
                pl.BlockSpec((1, CKK, P), lambda n: (n, 0, 0)),
                pl.BlockSpec((Cout, CKK), lambda n: (0, 0)),
                pl.BlockSpec((Cout, Cout), lambda n: (0, 0)),
            ],
            out_specs=pl.BlockSpec((1, Cout, P), lambda n: (n, 0, 0)),
        ),
        compiler_params=pltpu.CompilerParams(
            dimension_semantics=("parallel",)),
        cost_estimate=cost,
    )(patches_bf, w1_bf, w2_bf)

    # (N, Cout, P) -> NCHW: pure reshape, no transpose needed.
    return out.reshape(N, Cout, Hout, Wout)


def _reference(x, w_deconv, w_conv1x1, kernel_size, stride, padding):
    """Pure-JAX reference with matched precision (bf16 matmul operands, f32 accum)."""
    N, Cin, H, W = x.shape
    K = kernel_size
    Cout = w_deconv.shape[1]
    Hout = (H - 1) * stride - 2 * padding + K
    Wout = (W - 1) * stride - 2 * padding + K
    patches = _im2col_for_deconv(x, K, stride, padding, Hout, Wout)   # (N, CKK, P)
    wf = w_deconv[:, :, ::-1, ::-1]
    w1 = wf.transpose(1, 0, 2, 3).reshape(Cout, Cin * K * K)
    w2 = w_conv1x1.reshape(Cout, Cout)

    y = jnp.einsum("ok,nkp->nop",
                   w1.astype(jnp.bfloat16), patches.astype(jnp.bfloat16),
                   preferred_element_type=jnp.float32)
    mean = jnp.mean(y, axis=2, keepdims=True)
    var = jnp.mean((y - mean) ** 2, axis=2, keepdims=True)
    yn = (y - mean) * lax.rsqrt(var + EPS)
    act = jnp.where(yn >= 0, yn, NEG_SLOPE * yn)
    z = jnp.einsum("oc,ncp->nop",
                   w2.astype(jnp.bfloat16), act.astype(jnp.bfloat16),
                   preferred_element_type=jnp.float32)
    return z.reshape(N, Cout, Hout, Wout)


if __name__ == "__main__":
    # Module config: DeconvBlock(in_channel=4, out_channel=8, kernel_size=4,
    #                            stride=2, padding=1)   (typical 2x upsampling)
    N, Cin, H, W = 2, 4, 16, 16
    Cout, K, stride, padding = 8, 4, 2, 1

    key = jax.random.PRNGKey(0)
    kx, kw1, kw2 = jax.random.split(key, 3)
    x = jax.random.normal(kx, (N, Cin, H, W), jnp.float32)
    # ConvTranspose2d weight: (in_channel, out_channel, K, K)
    w_deconv = jax.random.normal(kw1, (Cin, Cout, K, K), jnp.float32) * 0.1
    # Conv2d 1x1 weight: (out_channel, out_channel, 1, 1)
    w_conv1x1 = jax.random.normal(kw2, (Cout, Cout, 1, 1), jnp.float32) * 0.1

    out = deconv_block(x, w_deconv, w_conv1x1, K, stride, padding)
    out = jax.block_until_ready(out)

    ref = jax.block_until_ready(_reference(x, w_deconv, w_conv1x1, K, stride, padding))
    Hout = (H - 1) * stride - 2 * padding + K
    Wout = (W - 1) * stride - 2 * padding + K
    assert out.shape == (N, Cout, Hout, Wout)
    assert jnp.allclose(out, ref, atol=2e-2, rtol=2e-2), float(jnp.max(jnp.abs(out - ref)))

    print("KERNEL_OK")
</pallas_src>

<mosaic_0001>
module attributes {stable_mosaic.version = 11 : i64} {
  func.func @_deconv_block_kernel(%arg0: i32, %arg1: memref<1x64x1024xbf16, #tpu.memory_space<vmem>>, %arg2: memref<8x64xbf16, #tpu.memory_space<vmem>>, %arg3: memref<8x8xbf16, #tpu.memory_space<vmem>>, %arg4: memref<1x8x1024xf32, #tpu.memory_space<vmem>>) attributes {dimension_semantics = [#tpu.dimension_semantics<parallel>], iteration_bounds = array<i64: 2>, scalar_prefetch = 0 : i64, scratch_operands = 0 : i64, tpu.core_type = #tpu.core_type<tc>, window_params = [{transform_indices = @transform_0, window_bounds = array<i64: 1, 64, 1024>}, {pipeline_mode = #tpu.pipeline_mode<synchronous>, transform_indices = @transform_1, window_bounds = array<i64: 8, 64>}, {pipeline_mode = #tpu.pipeline_mode<synchronous>, transform_indices = @transform_2, window_bounds = array<i64: 8, 8>}, {transform_indices = @transform_3, window_bounds = array<i64: 1, 8, 1024>}]} {
    %c0 = arith.constant 0 : index
    %c0_0 = arith.constant 0 : index
    %c0_1 = arith.constant 0 : index
    %0 = vector.load %arg1[%c0, %c0_0, %c0_1] : memref<1x64x1024xbf16, #tpu.memory_space<vmem>>, vector<1x64x1024xbf16>
    %1 = vector.shape_cast %0 : vector<1x64x1024xbf16> to vector<64x1024xbf16>
    %c0_2 = arith.constant 0 : index
    %c0_3 = arith.constant 0 : index
    %2 = vector.load %arg2[%c0_2, %c0_3] : memref<8x64xbf16, #tpu.memory_space<vmem>>, vector<8x64xbf16>
    %cst = arith.constant dense<0.000000e+00> : vector<8x1024xf32>
    %3 = tpu.matmul %2, %1, %cst {dimension_numbers = #tpu.dot_dimension_numbers<[1], [0], [0], [1], [0, 0, 1, 1], [], []>} : vector<8x64xbf16>, vector<64x1024xbf16>, vector<8x1024xf32> -> vector<8x1024xf32>
    %cst_4 = arith.constant dense<0.000000e+00> : vector<8xf32>
    %4 = vector.multi_reduction <add>, %3, %cst_4 [1] : vector<8x1024xf32> to vector<8xf32>
    %5 = vector.shape_cast %4 : vector<8xf32> to vector<8x1xf32>
    %cst_5 = arith.constant 1.024000e+03 : f32
    %6 = vector.broadcast %cst_5 : f32 to vector<8x1xf32>
    %7 = arith.divf %5, %6 : vector<8x1xf32>
    %8 = vector.broadcast %7 : vector<8x1xf32> to vector<8x1024xf32>
    %9 = arith.subf %3, %8 : vector<8x1024xf32>
    %10 = arith.mulf %9, %9 : vector<8x1024xf32>
    %cst_6 = arith.constant dense<0.000000e+00> : vector<8xf32>
    %11 = vector.multi_reduction <add>, %10, %cst_6 [1] : vector<8x1024xf32> to vector<8xf32>
    %12 = vector.shape_cast %11 : vector<8xf32> to vector<8x1xf32>
    %cst_7 = arith.constant 1.024000e+03 : f32
    %13 = vector.broadcast %cst_7 : f32 to vector<8x1xf32>
    %14 = arith.divf %12, %13 : vector<8x1xf32>
    %15 = vector.broadcast %7 : vector<8x1xf32> to vector<8x1024xf32>
    %16 = arith.subf %3, %15 : vector<8x1024xf32>
    %cst_8 = arith.constant 9.99999974E-6 : f32
    %17 = vector.broadcast %cst_8 : f32 to vector<8x1xf32>
    %18 = arith.addf %14, %17 : vector<8x1xf32>
    %19 = math.rsqrt %18 : vector<8x1xf32>
    %20 = vector.broadcast %19 : vector<8x1xf32> to vector<8x1024xf32>
    %21 = arith.mulf %16, %20 : vector<8x1024xf32>
    %cst_9 = arith.constant 0.000000e+00 : f32
    %22 = vector.broadcast %cst_9 : f32 to vector<8x1024xf32>
    %23 = arith.cmpf oge, %21, %22 : vector<8x1024xf32>
    %cst_10 = arith.constant 1.000000e-01 : f32
    %24 = vector.broadcast %cst_10 : f32 to vector<8x1024xf32>
    %25 = arith.mulf %24, %21 : vector<8x1024xf32>
    %26 = arith.select %23, %21, %25 : vector<8x1024xi1>, vector<8x1024xf32>
    %c0_11 = arith.constant 0 : index
    %c0_12 = arith.constant 0 : index
    %27 = vector.load %arg3[%c0_11, %c0_12] : memref<8x8xbf16, #tpu.memory_space<vmem>>, vector<8x8xbf16>
    %28 = arith.truncf %26 : vector<8x1024xf32> to vector<8x1024xbf16>
    %cst_13 = arith.constant dense<0.000000e+00> : vector<8x1024xf32>
    %29 = tpu.matmul %27, %28, %cst_13 {dimension_numbers = #tpu.dot_dimension_numbers<[1], [0], [0], [1], [0, 0, 1, 1], [], []>} : vector<8x8xbf16>, vector<8x1024xbf16>, vector<8x1024xf32> -> vector<8x1024xf32>
    %c0_14 = arith.constant 0 : index
    %c0_15 = arith.constant 0 : index
    %c0_16 = arith.constant 0 : index
    %30 = vector.load %arg4[%c0_14, %c0_15, %c0_16] : memref<1x8x1024xf32, #tpu.memory_space<vmem>>, vector<1x8x1024xf32>
    %31 = vector.shape_cast %30 : vector<1x8x1024xf32> to vector<8x1024xf32>
    %32 = vector.shape_cast %29 : vector<8x1024xf32> to vector<1x8x1024xf32>
    tpu.vector_store %arg4[%c0_14, %c0_15, %c0_16], %32 {strides = array<i32>} : memref<1x8x1024xf32, #tpu.memory_space<vmem>>, vector<1x8x1024xf32>,
    return
  }
  func.func @transform_0(%arg0: i32) -> (i32, i32, i32) {
    %c0_i32 = arith.constant 0 : i32
    %c0_i32_0 = arith.constant 0 : i32
    %c0_i32_1 = arith.constant 0 : i32
    return %arg0, %c0_i32, %c0_i32_0 : i32, i32, i32
  }
  func.func @transform_1(%arg0: i32) -> (i32, i32) {
    %c0_i32 = arith.constant 0 : i32
    %c0_i32_0 = arith.constant 0 : i32
    %c0_i32_1 = arith.constant 0 : i32
    return %c0_i32, %c0_i32_0 : i32, i32
  }
  func.func @transform_2(%arg0: i32) -> (i32, i32) {
    %c0_i32 = arith.constant 0 : i32
    %c0_i32_0 = arith.constant 0 : i32
    %c0_i32_1 = arith.constant 0 : i32
    return %c0_i32, %c0_i32_0 : i32, i32
  }
  func.func @transform_3(%arg0: i32) -> (i32, i32, i32) {
    %c0_i32 = arith.constant 0 : i32
    %c0_i32_0 = arith.constant 0 : i32
    %c0_i32_1 = arith.constant 0 : i32
    return %arg0, %c0_i32, %c0_i32_0 : i32, i32, i32
  }
}

</mosaic_0001>

<llo_original>
// kernel: tpu_custom_call.1
$region0: #{tpu_custom_call.1}
  #allocation0 [shape = 'u32[]', space=smem, size = 0x4, offset = 0x4, fixed_abs, tag = 'smem constant byte address 0x4 - core index']
  #allocation1 [shape = 'u32[144,128]{1,0:T(1,128)}', space=vmem, size = 0x12000, scoped, tag = 'internal scratch']
  %s0 = inlined_call_operand.hbm [shape: bf16[2,64,1024], index: 0, kind: input, shape index: {}]
  %s1 = inlined_call_operand.hbm [shape: bf16[8,64], index: 1, kind: input, shape index: {}]
  %s2 = inlined_call_operand.vmem [shape: bf16[8,8], index: 2, kind: input, shape index: {}]
  %s3 = inlined_call_operand.hbm [shape: f32[2,8,1024], index: 3, kind: output, shape index: {}]
  %s4 = sld [smem:[#allocation0]]
  $region53: #{tpu_custom_call.1} parent=0
    _
  %s6 = ssub.s32 1, %s4
  %s7 = scalar_select 0, %s6, %s4
  $region1: #{tpu_custom_call.1} parent=0
    #allocation2 [shape = 'u8[262144]{0}', space=vmem, size = 0x40000, scoped, tag = 'input window, operand 0']
    #allocation3 [shape = 's32[2]{0}', space=sflag, size = 0x8, scoped, tag = 'scoped memory for tpu_custom_call.1']
    #allocation4 [shape = 's32[2]{0}', space=sflag, size = 0x8, scoped, tag = 'scoped memory for tpu_custom_call.1']
    #allocation5 [shape = 'u8[2048]{0}', space=vmem, size = 0x800, scoped, tag = 'input window, operand 1, single buffered']
    #allocation6 [shape = 's32[1]{0}', space=sflag, size = 0x4, scoped, tag = 'scoped memory for tpu_custom_call.1']
    #allocation7 [shape = 'u8[65536]{0}', space=vmem, size = 0x10000, scoped, tag = 'output window, operand 0']
    %8 = vsyncpa [#allocation3], 0
    %s9 = scalar_lea.sflag [#allocation3], 1
    %10 = vsyncpa %s9, 0
    %11 = vsyncpa [#allocation6], 0
    %12 = vsyncpa [#allocation4], 0
    %s13 = scalar_lea.sflag [#allocation4], 1
    %14 = vsyncpa %s13, 0
    loop: start=0, step=1, limit=4
    $region2: #{tpu_custom_call.1} parent=1 // loop_pre_header
      _
    $region3: #{tpu_custom_call.1} parent=1 // loop_header
      %s16 = sphi 0, %s20
      %p17 = scmp.ge.s32.totalorder %s16, 4
      %s26 = sphi 0, %s28
      %s29 = sphi 0, %s26
      %s30 = sphi 0, %s29
      %s46 = sphi 0, %s30
      %s50 = sphi 0, %s50
      %s52 = sphi 0, %s50
      %s53 = sphi 0, %s52
      %s67 = sphi 0, %s53
      %s71 = sphi 0, %s71
      %s73 = sphi 0, %s71
      %s74 = sphi 0, %s73
      %s88 = sphi 0, %s74
      %s94 = sphi 0, %s96
      %s97 = sphi 0, %s94
      %s98 = sphi 0, %s97
      %s114 = sphi 0, %s98
    $region4: #{tpu_custom_call.1} parent=1 // loop_header_branch
      %19 = sbr.rel (%p17) target = $region8
    $region5: #{tpu_custom_call.1} parent=1 // loop_body
      %s21 = ssub.s32 %s16, 1
      %s22 = ssub.s32 %s16, 2
      %s23 = sadd.s32 %s16, 1
      %s24 = ssub.s32 %s16, %s23
      %p25 = scmp.eq.s32.totalorder %s24, 0
      %s27 = sadd.s32 %s26, 1
      %s28 = scalar_select %p25, %s26, %s27
      %p31 = pneg %p25
      %p32 = scmp.eq.s32.totalorder %s16, 1
      %p33 = por %p31, %p32
      %p34 = scmp.ne.s32.totalorder %s26, %s29
      %p35 = scmp.eq.s32.totalorder %s16, 0
      %p36 = por %p34, %p35
      %p37 = scmp.ne.s32.totalorder %s26, %s29
      %p38 = scmp.eq.s32.totalorder %s21, 1
      %p39 = por %p37, %p38
      %p40 = scmp.ne.s32.totalorder %s29, %s30
      %p41 = scmp.eq.s32.totalorder %s21, 0
      %p42 = por %p40, %p41
      %p43 = scmp.ne.s32.totalorder %s29, %s30
      %p44 = scmp.eq.s32.totalorder %s22, 1
      %p45 = por %p43, %p44
      %p47 = scmp.ne.s32.totalorder %s30, %s46
      %p48 = scmp.eq.s32.totalorder %s22, 0
      %p49 = por %p47, %p48
      %s51 = sadd.s32 %s50, 1
      %p54 = scmp.eq.s32.totalorder %s16, 1
      %p55 = scmp.ne.s32.totalorder %s50, %s52
      %p56 = scmp.eq.s32.totalorder %s16, 0
      %p57 = por %p55, %p56
      %p58 = scmp.ne.s32.totalorder %s50, %s52
      %p59 = scmp.eq.s32.totalorder %s21, 1
      %p60 = por %p58, %p59
      %p61 = scmp.ne.s32.totalorder %s52, %s53
      %p62 = scmp.eq.s32.totalorder %s21, 0
      %p63 = por %p61, %p62
      %p64 = scmp.ne.s32.totalorder %s52, %s53
      %p65 = scmp.eq.s32.totalorder %s22, 1
      %p66 = por %p64, %p65
      %p68 = scmp.ne.s32.totalorder %s53, %s67
      %p69 = scmp.eq.s32.totalorder %s22, 0
      %p70 = por %p68, %p69
      %s72 = sadd.s32 %s71, 1
      %p75 = scmp.eq.s32.totalorder %s16, 1
      %p76 = scmp.ne.s32.totalorder %s71, %s73
      %p77 = scmp.eq.s32.totalorder %s16, 0
      %p78 = por %p76, %p77
      %p79 = scmp.ne.s32.totalorder %s71, %s73
      %p80 = scmp.eq.s32.totalorder %s21, 1
      %p81 = por %p79, %p80
      %p82 = scmp.ne.s32.totalorder %s73, %s74
      %p83 = scmp.eq.s32.totalorder %s21, 0
      %p84 = por %p82, %p83
      %p85 = scmp.ne.s32.totalorder %s73, %s74
      %p86 = scmp.eq.s32.totalorder %s22, 1
      %p87 = por %p85, %p86
      %p89 = scmp.ne.s32.totalorder %s74, %s88
      %p90 = scmp.eq.s32.totalorder %s22, 0
      %p91 = por %p89, %p90
      %s92 = ssub.s32 %s16, %s23
      %p93 = scmp.eq.s32.totalorder %s92, 0
      %s95 = sadd.s32 %s94, 1
      %s96 = scalar_select %p93, %s94, %s95
      %p99 = pneg %p93
      %p100 = scmp.eq.s32.totalorder %s16, 1
      %p101 = por %p99, %p100
      %p102 = scmp.ne.s32.totalorder %s94, %s97
      %p103 = scmp.eq.s32.totalorder %s16, 0
      %p104 = por %p102, %p103
      %p105 = scmp.ne.s32.totalorder %s94, %s97
      %p106 = scmp.eq.s32.totalorder %s21, 1
      %p107 = por %p105, %p106
      %p108 = scmp.ne.s32.totalorder %s97, %s98
      %p109 = scmp.eq.s32.totalorder %s21, 0
      %p110 = por %p108, %p109
      %p111 = scmp.ne.s32.totalorder %s97, %s98
      %p112 = scmp.eq.s32.totalorder %s22, 1
      %p113 = por %p111, %p112
      %p115 = scmp.ne.s32.totalorder %s98, %s114
      %p116 = scmp.eq.s32.totalorder %s22, 0
      %p117 = por %p115, %p116
      %p118 = scmp.le.s32.totalorder 1, %s16
      %p119 = scmp.lt.s32.totalorder %s16, 3
      %p120 = pnand %p118, %p119
      %p121 = pneg %p120
      // Predicated region
      $region9: #{tpu_custom_call.1} parent=5 // pred_check
        _
      $region10: #{tpu_custom_call.1} parent=5 // pred_check_branch
        %123 = sbr.rel (%p120) target = $region12
      $region11: #{tpu_custom_call.1} parent=5 // pred_region
        %s124 = ssub.s32 %s16, 1
        // Predicated region
        $region13: #{tpu_custom_call.1} parent=11 // pred_check
          %p125 = pneg %p63
        $region14: #{tpu_custom_call.1} parent=11 // pred_check_branch
          %127 = sbr.rel (%p125) target = $region16
        $region15: #{tpu_custom_call.1} parent=11 // pred_region
          %s129 = ssub.s32 64, 64
          %130 = vsyncadd [#allocation6], %s129
          %s132 = sshll.u32 [#allocation5], 4
          %s133 = int_to_ptr.vmem [resolvable:$true] %s132
          %135 = dma.hbm_to_vmem [thread:$0]  %s1, 64, %s133, [#allocation6]
        $region16: #{tpu_custom_call.1} parent=11 // pred_fallthru
          _
        // Predicated region
        $region17: #{tpu_custom_call.1} parent=11 // pred_check
          %p136 = pneg %p84
        $region18: #{tpu_custom_call.1} parent=11 // pred_check_branch
          %138 = sbr.rel (%p136) target = $region20
        $region19: #{tpu_custom_call.1} parent=11 // pred_region
          _
        $region20: #{tpu_custom_call.1} parent=11 // pred_fallthru
          _
      $region12: #{tpu_custom_call.1} parent=5 // pred_fallthru
        _
      %p139 = scmp.lt.s32.totalorder %s16, 2
      // Predicated region
      $region21: #{tpu_custom_call.1} parent=5 // pred_check
        %p140 = pneg %p139
      $region22: #{tpu_custom_call.1} parent=5 // pred_check_branch
        %142 = sbr.rel (%p140) target = $region24
      $region23: #{tpu_custom_call.1} parent=5 // pred_region
        // Predicated region
        $region25: #{tpu_custom_call.1} parent=23 // pred_check
          %p143 = pneg %p36
        $region26: #{tpu_custom_call.1} parent=23 // pred_check_branch
          %145 = sbr.rel (%p143) target = $region28
        $region27: #{tpu_custom_call.1} parent=23 // pred_region
          %s146 = sand.u32 %s26, 1
          %s147 = scalar_lea.sflag [#allocation3], %s146
          %s148 = sand.u32 %s26, 1
          %s149 = smul.addr %s148, 256
          %s150 = scalar_lea.vmem [#allocation2], %s149
          %s152 = ssub.s32 4096, 4096
          %153 = vsyncadd %s147, %s152
          %s154 = smul.addr %s16, 64
          %s155 = smul.addr %s154, 64
          %s156 = scalar_lea.hbm %s0, %s155
          %s157 = sshll.u32 %s150, 4
          %s158 = int_to_ptr.vmem [resolvable:$true] %s157
          %163 = dma.hbm_to_vmem [thread:$0]  %s156, 4096, %s158, %s147, 512, 512, 32
        $region28: #{tpu_custom_call.1} parent=23 // pred_fallthru
          _
      $region24: #{tpu_custom_call.1} parent=5 // pred_fallthru
        _
      %p164 = scmp.le.s32.totalorder 1, %s16
      %p165 = scmp.lt.s32.totalorder %s16, 3
      %p166 = pnand %p164, %p165
      %p167 = pneg %p166
      // Predicated region
      $region29: #{tpu_custom_call.1} parent=5 // pred_check
        _
      $region30: #{tpu_custom_call.1} parent=5 // pred_check_branch
        %169 = sbr.rel (%p166) target = $region32
      $region31: #{tpu_custom_call.1} parent=5 // pred_region
        %s170 = ssub.s32 %s16, 1
        %s171 = sand.u32 %s29, 1
        %s172 = scalar_lea.sflag [#allocation3], %s171
        %s173 = sand.u32 %s29, 1
        %s174 = smul.addr %s173, 256
        %s175 = scalar_lea.vmem [#allocation2], %s174
        // Predicated region
        $region33: #{tpu_custom_call.1} parent=31 // pred_check
          %p176 = pneg %p42
        $region34: #{tpu_custom_call.1} parent=31 // pred_check_branch
          %178 = sbr.rel (%p176) target = $region36
        $region35: #{tpu_custom_call.1} parent=31 // pred_region
          %179 = dma.done %s172, 4096
        $region36: #{tpu_custom_call.1} parent=31 // pred_fallthru
          _
        // Predicated region
        $region37: #{tpu_custom_call.1} parent=31 // pred_check
          %p180 = pneg %p63
        $region38: #{tpu_custom_call.1} parent=31 // pred_check_branch
          %182 = sbr.rel (%p180) target = $region40
        $region39: #{tpu_custom_call.1} parent=31 // pred_region
          %183 = dma.done [#allocation6], 64
        $region40: #{tpu_custom_call.1} parent=31 // pred_fallthru
          _
        %s184 = sand.u32 %s29, 1
        %s185 = scalar_lea.sflag [#allocation3], %s184
        %s186 = sand.u32 %s29, 1
        %s187 = smul.addr %s186, 256
        %s188 = scalar_lea.vmem [#allocation2], %s187
        %p189 = pneg %p42
        %p190 = pneg %p39
        %p191 = pneg %p63
        %p192 = pneg %p60
        %p193 = pneg %p84
        %p194 = pneg %p81
        %p195 = pneg %p110
        %p196 = pneg %p107
        %s197 = sand.u32 %s97, 1
        %s198 = scalar_lea.sflag [#allocation4], %s197
        %s199 = sand.u32 %s97, 1
        %s200 = smul.addr %s199, 64
        %s201 = scalar_lea.vmem [#allocation7], %s200
        %v203 = vld [vmem:[%s175] sm:$0xff]
        %v204 = vld [vmem:[%s175 + $0x8] sm:$0xff]
        %v205 = vld [vmem:[%s175 + $0x10] sm:$0xff]
        %v206 = vld [vmem:[%s175 + $0x18] sm:$0xff]
        %v207 = vld [vmem:[%s175 + $0x20] sm:$0xff]
        %v208 = vld [vmem:[%s175 + $0x28] sm:$0xff]
        %v209 = vld [vmem:[%s175 + $0x30] sm:$0xff]
        %v210 = vld [vmem:[%s175 + $0x38] sm:$0xff]
        %v211 = vld [vmem:[%s175 + $0x40] sm:$0xff]
        %v212 = vld [vmem:[%s175 + $0x48] sm:$0xff]
        %v213 = vld [vmem:[%s175 + $0x50] sm:$0xff]
        %v214 = vld [vmem:[%s175 + $0x58] sm:$0xff]
        %v215 = vld [vmem:[%s175 + $0x60] sm:$0xff]
        %v216 = vld [vmem:[%s175 + $0x68] sm:$0xff]
        %v217 = vld [vmem:[%s175 + $0x70] sm:$0xff]
        %v218 = vld [vmem:[%s175 + $0x78] sm:$0xff]
        %v219 = vld [vmem:[%s175 + $0x80] sm:$0xff]
        %v220 = vld [vmem:[%s175 + $0x88] sm:$0xff]
        %v221 = vld [vmem:[%s175 + $0x90] sm:$0xff]
        %v222 = vld [vmem:[%s175 + $0x98] sm:$0xff]
        %v223 = vld [vmem:[%s175 + $0xa0] sm:$0xff]
        %v224 = vld [vmem:[%s175 + $0xa8] sm:$0xff]
        %v225 = vld [vmem:[%s175 + $0xb0] sm:$0xff]
        %v226 = vld [vmem:[%s175 + $0xb8] sm:$0xff]
        %v227 = vld [vmem:[%s175 + $0xc0] sm:$0xff]
        %v228 = vld [vmem:[%s175 + $0xc8] sm:$0xff]
        %v229 = vld [vmem:[%s175 + $0xd0] sm:$0xff]
        %v230 = vld [vmem:[%s175 + $0xd8] sm:$0xff]
        %v231 = vld [vmem:[%s175 + $0xe0] sm:$0xff]
        %v232 = vld [vmem:[%s175 + $0xe8] sm:$0xff]
        %v233 = vld [vmem:[%s175 + $0xf0] sm:$0xff]
        %v234 = vld [vmem:[%s175 + $0xf8] sm:$0xff]
        %v235 = vld [vmem:[#allocation5] sm:$0xf]
        %v268 = vunpack.c.l.b16 %v203
        %v269 = vunpack.c.h.b16 %v203
        %v270 = vunpack.c.l.b16 %v204
        %v271 = vunpack.c.h.b16 %v204
        %v272 = vunpack.c.l.b16 %v205
        %v273 = vunpack.c.h.b16 %v205
        %v274 = vunpack.c.l.b16 %v206
        %v275 = vunpack.c.h.b16 %v206
        %v276 = vunpack.c.l.b16 %v207
        %v277 = vunpack.c.h.b16 %v207
        %v278 = vunpack.c.l.b16 %v208
        %v279 = vunpack.c.h.b16 %v208
        %v280 = vunpack.c.l.b16 %v209
        %v281 = vunpack.c.h.b16 %v209
        %v282 = vunpack.c.l.b16 %v210
        %v283 = vunpack.c.h.b16 %v210
        %v284 = vunpack.c.l.b16 %v211
        %v285 = vunpack.c.h.b16 %v211
        %v286 = vunpack.c.l.b16 %v212
        %v287 = vunpack.c.h.b16 %v212
        %v288 = vunpack.c.l.b16 %v213
        %v289 = vunpack.c.h.b16 %v213
        %v290 = vunpack.c.l.b16 %v214
        %v291 = vunpack.c.h.b16 %v214
        %v292 = vunpack.c.l.b16 %v215
        %v293 = vunpack.c.h.b16 %v215
        %v294 = vunpack.c.l.b16 %v216
        %v295 = vunpack.c.h.b16 %v216
        %v296 = vunpack.c.l.b16 %v217
        %v297 = vunpack.c.h.b16 %v217
        %v298 = vunpack.c.l.b16 %v218
        %v299 = vunpack.c.h.b16 %v218
        %v300 = vunpack.c.l.b16 %v219
        %v301 = vunpack.c.h.b16 %v219
        %v302 = vunpack.c.l.b16 %v220
        %v303 = vunpack.c.h.b16 %v220
        %v304 = vunpack.c.l.b16 %v221
        %v305 = vunpack.c.h.b16 %v221
        %v306 = vunpack.c.l.b16 %v222
        %v307 = vunpack.c.h.b16 %v222
        %v308 = vunpack.c.l.b16 %v223
        %v309 = vunpack.c.h.b16 %v223
        %v310 = vunpack.c.l.b16 %v224
        %v311 = vunpack.c.h.b16 %v224
        %v312 = vunpack.c.l.b16 %v225
        %v313 = vunpack.c.h.b16 %v225
        %v314 = vunpack.c.l.b16 %v226
        %v315 = vunpack.c.h.b16 %v226
        %v316 = vunpack.c.l.b16 %v227
        %v317 = vunpack.c.h.b16 %v227
        %v318 = vunpack.c.l.b16 %v228
        %v319 = vunpack.c.h.b16 %v228
        %v320 = vunpack.c.l.b16 %v229
        %v321 = vunpack.c.h.b16 %v229
        %v322 = vunpack.c.l.b16 %v230
        %v323 = vunpack.c.h.b16 %v230
        %v324 = vunpack.c.l.b16 %v231
        %v325 = vunpack.c.h.b16 %v231
        %v326 = vunpack.c.l.b16 %v232
        %v327 = vunpack.c.h.b16 %v232
        %v328 = vunpack.c.l.b16 %v233
        %v329 = vunpack.c.h.b16 %v233
        %v330 = vunpack.c.l.b16 %v234
        %v331 = vunpack.c.h.b16 %v234
        %v332 = vpack.c.b16 %v276, %v268
        %v333 = vpack.c.b16 %v277, %v269
        %v334 = vpack.c.b16 %v278, %v270
        %v335 = vpack.c.b16 %v279, %v271
        %v336 = vpack.c.b16 %v280, %v272
        %v337 = vpack.c.b16 %v281, %v273
        %v338 = vpack.c.b16 %v282, %v274
        %v339 = vpack.c.b16 %v283, %v275
        %v340 = vpack.c.b16 %v292, %v284
        %v341 = vpack.c.b16 %v293, %v285
        %v342 = vpack.c.b16 %v294, %v286
        %v343 = vpack.c.b16 %v295, %v287
        %v344 = vpack.c.b16 %v296, %v288
        %v345 = vpack.c.b16 %v297, %v289
        %v346 = vpack.c.b16 %v298, %v290
        %v347 = vpack.c.b16 %v299, %v291
        %v348 = vpack.c.b16 %v308, %v300
        %v349 = vpack.c.b16 %v309, %v301
        %v350 = vpack.c.b16 %v310, %v302
        %v351 = vpack.c.b16 %v311, %v303
        %v352 = vpack.c.b16 %v312, %v304
        %v353 = vpack.c.b16 %v313, %v305
        %v354 = vpack.c.b16 %v314, %v306
        %v355 = vpack.c.b16 %v315, %v307
        %v356 = vpack.c.b16 %v324, %v316
        %v357 = vpack.c.b16 %v325, %v317
        %v358 = vpack.c.b16 %v326, %v318
        %v359 = vpack.c.b16 %v327, %v319
        %v360 = vpack.c.b16 %v328, %v320
        %v361 = vpack.c.b16 %v329, %v321
        %v362 = vpack.c.b16 %v330, %v322
        %v363 = vpack.c.b16 %v331, %v323
        %vm396 = vcmask 523264
        %v398 = vsel %vm396, %v235, 0
        %400 = vmatprep.subr.bf16.mxu0 %v333
        %401 = vmatpush1.bf16.msra.mxu0 %v332
        %402 = vmatprep.subr.bf16.mxu0 %v341
        %403 = vmatpush1.bf16.msra.mxu0 %v340
        %404 = vmatprep.subr.bf16.mxu0 %v349
        %405 = vmatpush1.bf16.msra.mxu0 %v348
        %406 = vmatprep.subr.bf16.mxu0 %v357
        %407 = vmatpush1.bf16.msra.mxu0 %v356
        %408 = vmatprep.subr.bf16.mxu0 0
        %409 = vmatpush1.bf16.msra.mxu0 0
        %410 = vmatprep.subr.bf16.mxu0 0
        %411 = vmatpush1.bf16.msra.mxu0 0
        %412 = vmatprep.subr.bf16.mxu0 0
        %413 = vmatpush1.bf16.msra.mxu0 0
        %414 = vmatprep.subr.bf16.mxu0 0
        %415 = vmatpush1.bf16.msra.mxu0 0
        %416 = vmatprep.subr.bf16.mxu0 0
        %417 = vmatpush1.bf16.msra.mxu0 0
        %418 = vmatprep.subr.bf16.mxu0 0
        %419 = vmatpush1.bf16.msra.mxu0 0
        %420 = vmatprep.subr.bf16.mxu0 0
        %421 = vmatpush1.bf16.msra.mxu0 0
        %422 = vmatprep.subr.bf16.mxu0 0
        %423 = vmatpush1.bf16.msra.mxu0 0
        %424 = vmatprep.subr.bf16.mxu0 0
        %425 = vmatpush1.bf16.msra.mxu0 0
        %426 = vmatprep.subr.bf16.mxu0 0
        %427 = vmatpush1.bf16.msra.mxu0 0
        %428 = vmatprep.subr.bf16.mxu0 0
        %429 = vmatpush1.bf16.msra.mxu0 0
        %430 = vmatprep.subr.bf16.mxu0 0
        %431 = vmatpush1.bf16.msra.mxu0 0
        %432 = vmatprep.mubr.bf16.mxu0 0
        %433 = vmatmul.mubr.bf16.gmra.mrb[0].mxu0 %v398
        %v434 = vpop.f32.mrb[0].mxu0
        %v435 = vadd.f32 0.0, %v434
        %v436 = vpop.f32.mrb[0].mxu0
        %v437 = vadd.f32 0.0, %v436
        %v438 = vpop.f32.mrb[0].mxu0
        %v439 = vpop.f32.mrb[0].mxu0
        %440 = vdwg.mxu0
        %441 = vmatprep.subr.bf16.mxu0 %v335
        %442 = vmatpush1.bf16.msra.mxu0 %v334
        %443 = vmatprep.subr.bf16.mxu0 %v343
        %444 = vmatpush1.bf16.msra.mxu0 %v342
        %445 = vmatprep.subr.bf16.mxu0 %v351
        %446 = vmatpush1.bf16.msra.mxu0 %v350
        %447 = vmatprep.subr.bf16.mxu0 %v359
        %448 = vmatpush1.bf16.msra.mxu0 %v358
        %449 = vmatprep.subr.bf16.mxu0 0
        %450 = vmatpush1.bf16.msra.mxu0 0
        %451 = vmatprep.subr.bf16.mxu0 0
        %452 = vmatpush1.bf16.msra.mxu0 0
        %453 = vmatprep.subr.bf16.mxu0 0
        %454 = vmatpush1.bf16.msra.mxu0 0
        %455 = vmatprep.subr.bf16.mxu0 0
        %456 = vmatpush1.bf16.msra.mxu0 0
        %457 = vmatprep.subr.bf16.mxu0 0
        %458 = vmatpush1.bf16.msra.mxu0 0
        %459 = vmatprep.subr.bf16.mxu0 0
        %460 = vmatpush1.bf16.msra.mxu0 0
        %461 = vmatprep.subr.bf16.mxu0 0
        %462 = vmatpush1.bf16.msra.mxu0 0
        %463 = vmatprep.subr.bf16.mxu0 0
        %464 = vmatpush1.bf16.msra.mxu0 0
        %465 = vmatprep.subr.bf16.mxu0 0
        %466 = vmatpush1.bf16.msra.mxu0 0
        %467 = vmatprep.subr.bf16.mxu0 0
        %468 = vmatpush1.bf16.msra.mxu0 0
        %469 = vmatprep.subr.bf16.mxu0 0
        %470 = vmatpush1.bf16.msra.mxu0 0
        %471 = vmatprep.subr.bf16.mxu0 0
        %472 = vmatpush1.bf16.msra.mxu0 0
        %473 = vmatprep.mubr.bf16.mxu0 0
        %474 = vmatmul.mubr.bf16.gmra.mrb[0].mxu0 %v398
        %v475 = vpop.f32.mrb[0].mxu0
        %v476 = vadd.f32 0.0, %v475
        %v477 = vpop.f32.mrb[0].mxu0
        %v478 = vadd.f32 0.0, %v477
        %v479 = vpop.f32.mrb[0].mxu0
        %v480 = vpop.f32.mrb[0].mxu0
        %481 = vdwg.mxu0
        %482 = vmatprep.subr.bf16.mxu0 %v337
        %483 = vmatpush1.bf16.msra.mxu0 %v336
        %484 = vmatprep.subr.bf16.mxu0 %v345
        %485 = vmatpush1.bf16.msra.mxu0 %v344
        %486 = vmatprep.subr.bf16.mxu0 %v353
        %487 = vmatpush1.bf16.msra.mxu0 %v352
        %488 = vmatprep.subr.bf16.mxu0 %v361
        %489 = vmatpush1.bf16.msra.mxu0 %v360
        %490 = vmatprep.subr.bf16.mxu0 0
        %491 = vmatpush1.bf16.msra.mxu0 0
        %492 = vmatprep.subr.bf16.mxu0 0
        %493 = vmatpush1.bf16.msra.mxu0 0
        %494 = vmatprep.subr.bf16.mxu0 0
        %495 = vmatpush1.bf16.msra.mxu0 0
        %496 = vmatprep.subr.bf16.mxu0 0
        %497 = vmatpush1.bf16.msra.mxu0 0
        %498 = vmatprep.subr.bf16.mxu0 0
        %499 = vmatpush1.bf16.msra.mxu0 0
        %500 = vmatprep.subr.bf16.mxu0 0
        %501 = vmatpush1.bf16.msra.mxu0 0
        %502 = vmatprep.subr.bf16.mxu0 0
        %503 = vmatpush1.bf16.msra.mxu0 0
        %504 = vmatprep.subr.bf16.mxu0 0
        %505 = vmatpush1.bf16.msra.mxu0 0
        %506 = vmatprep.subr.bf16.mxu0 0
        %507 = vmatpush1.bf16.msra.mxu0 0
        %508 = vmatprep.subr.bf16.mxu0 0
        %509 = vmatpush1.bf16.msra.mxu0 0
        %510 = vmatprep.subr.bf16.mxu0 0
        %511 = vmatpush1.bf16.msra.mxu0 0
        %512 = vmatprep.subr.bf16.mxu0 0
        %513 = vmatpush1.bf16.msra.mxu0 0
        %514 = vmatprep.mubr.bf16.mxu0 0
        %515 = vmatmul.mubr.bf16.gmra.mrb[0].mxu0 %v398
        %v516 = vpop.f32.mrb[0].mxu0
        %v517 = vadd.f32 0.0, %v516
        %v518 = vpop.f32.mrb[0].mxu0
        %v519 = vadd.f32 0.0, %v518
        %v520 = vpop.f32.mrb[0].mxu0
        %v521 = vpop.f32.mrb[0].mxu0
        %522 = vdwg.mxu0
        %523 = vmatprep.subr.bf16.mxu0 %v339
        %524 = vmatpush1.bf16.msra.mxu0 %v338
        %525 = vmatprep.subr.bf16.mxu0 %v347
        %526 = vmatpush1.bf16.msra.mxu0 %v346
        %527 = vmatprep.subr.bf16.mxu0 %v355
        %528 = vmatpush1.bf16.msra.mxu0 %v354
        %529 = vmatprep.subr.bf16.mxu0 %v363
        %530 = vmatpush1.bf16.msra.mxu0 %v362
        %531 = vmatprep.subr.bf16.mxu0 0
        %532 = vmatpush1.bf16.msra.mxu0 0
        %533 = vmatprep.subr.bf16.mxu0 0
        %534 = vmatpush1.bf16.msra.mxu0 0
        %535 = vmatprep.subr.bf16.mxu0 0
        %536 = vmatpush1.bf16.msra.mxu0 0
        %537 = vmatprep.subr.bf16.mxu0 0
        %538 = vmatpush1.bf16.msra.mxu0 0
        %539 = vmatprep.subr.bf16.mxu0 0
        %540 = vmatpush1.bf16.msra.mxu0 0
        %541 = vmatprep.subr.bf16.mxu0 0
        %542 = vmatpush1.bf16.msra.mxu0 0
        %543 = vmatprep.subr.bf16.mxu0 0
        %544 = vmatpush1.bf16.msra.mxu0 0
        %545 = vmatprep.subr.bf16.mxu0 0
        %546 = vmatpush1.bf16.msra.mxu0 0
        %547 = vmatprep.subr.bf16.mxu0 0
        %548 = vmatpush1.bf16.msra.mxu0 0
        %549 = vmatprep.subr.bf16.mxu0 0
        %550 = vmatpush1.bf16.msra.mxu0 0
        %551 = vmatprep.subr.bf16.mxu0 0
        %552 = vmatpush1.bf16.msra.mxu0 0
        %553 = vmatprep.subr.bf16.mxu0 0
        %554 = vmatpush1.bf16.msra.mxu0 0
        %555 = vmatprep.mubr.bf16.mxu0 0
        %556 = vmatmul.mubr.bf16.gmra.mrb[0].mxu0 %v398
        %v557 = vpop.f32.mrb[0].mxu0
        %v558 = vadd.f32 0.0, %v557
        %v559 = vpop.f32.mrb[0].mxu0
        %v560 = vadd.f32 0.0, %v559
        %v561 = vpop.f32.mrb[0].mxu0
        %v562 = vpop.f32.mrb[0].mxu0
        %563 = vdwg.mxu0
        %v564 = vadd.f32 %v435, %v437
        %v565 = vadd.f32 %v564, %v476
        %v566 = vadd.f32 %v565, %v478
        %v567 = vadd.f32 %v566, %v517
        %v568 = vadd.f32 %v567, %v519
        %v569 = vadd.f32 %v568, %v558
        %v570 = vadd.f32 %v569, %v560
        %571 = vadd.xlane.f32.xlu0 %v570
        %v572 = vpop.xlane.xlu0 %571
        %v573 = vrcp.pop 1024.0
        %v574 = vmul.f32 %v572, %v573
        %v575 = vsub.f32 %v435, %v574
        %v576 = vsub.f32 %v437, %v574
        %v577 = vsub.f32 %v476, %v574
        %v578 = vsub.f32 %v478, %v574
        %v579 = vsub.f32 %v517, %v574
        %v580 = vsub.f32 %v519, %v574
        %v581 = vsub.f32 %v558, %v574
        %v582 = vsub.f32 %v560, %v574
        %v583 = vmul.f32 %v575, %v575
        %v584 = vmul.f32 %v576, %v576
        %v585 = vmul.f32 %v577, %v577
        %v586 = vmul.f32 %v578, %v578
        %v587 = vmul.f32 %v579, %v579
        %v588 = vmul.f32 %v580, %v580
        %v589 = vmul.f32 %v581, %v581
        %v590 = vmul.f32 %v582, %v582
        %v591 = vadd.f32 %v583, %v584
        %v592 = vadd.f32 %v591, %v585
        %v593 = vadd.f32 %v592, %v586
        %v594 = vadd.f32 %v593, %v587
        %v595 = vadd.f32 %v594, %v588
        %v596 = vadd.f32 %v595, %v589
        %v597 = vadd.f32 %v596, %v590
        %598 = vadd.xlane.f32.xlu0 %v597
        %v599 = vpop.xlane.xlu0 %598
        %v600 = vmul.f32 %v599, %v573
        %v601 = vadd.f32 %v600, 1e-05
        %v602 = vrsqrt.pop %v601
        %v603 = vmul.f32 %v575, %v602
        %v604 = vmul.f32 %v576, %v602
        %v605 = vmul.f32 %v577, %v602
        %v606 = vmul.f32 %v578, %v602
        %v607 = vmul.f32 %v579, %v602
        %v608 = vmul.f32 %v580, %v602
        %v609 = vmul.f32 %v581, %v602
        %v610 = vmul.f32 %v582, %v602
        %vm611 = vcmp.ge.f32.partialorder %v603, 0.0
        %vm612 = vcmp.ge.f32.partialorder %v604, 0.0
        %vm613 = vcmp.ge.f32.partialorder %v605, 0.0
        %vm614 = vcmp.ge.f32.partialorder %v606, 0.0
        %vm615 = vcmp.ge.f32.partialorder %v607, 0.0
        %vm616 = vcmp.ge.f32.partialorder %v608, 0.0
        %vm617 = vcmp.ge.f32.partialorder %v609, 0.0
        %vm618 = vcmp.ge.f32.partialorder %v610, 0.0
        %v619 = vmul.f32 %v603, 0.1
        %v620 = vmul.f32 %v604, 0.1
        %v621 = vmul.f32 %v605, 0.1
        %v622 = vmul.f32 %v606, 0.1
        %v623 = vmul.f32 %v607, 0.1
        %v624 = vmul.f32 %v608, 0.1
        %v625 = vmul.f32 %v609, 0.1
        %v626 = vmul.f32 %v610, 0.1
        %v627 = vsel %vm611, %v603, %v619
        %v628 = vsel %vm612, %v604, %v620
        %v629 = vsel %vm613, %v605, %v621
        %v630 = vsel %vm614, %v606, %v622
        %v631 = vsel %vm615, %v607, %v623
        %v632 = vsel %vm616, %v608, %v624
        %v633 = vsel %vm617, %v609, %v625
        %v634 = vsel %vm618, %v610, %v626
        %v635 = vld [vmem:[%s2] sm:$0xf]
        %v636 = vpack.c.bf16 %v627, %v627
        %v637 = vpack.c.bf16 %v628, %v628
        %v638 = vpack.c.bf16 %v629, %v629
        %v639 = vpack.c.bf16 %v630, %v630
        %v640 = vpack.c.bf16 %v631, %v631
        %v641 = vpack.c.bf16 %v632, %v632
        %v642 = vpack.c.bf16 %v633, %v633
        %v643 = vpack.c.bf16 %v634, %v634
        %vm644 = vcmask 64512
        %v646 = vsel %vm644, %v635, 0
        %vm648 = vcmask 1043456
        %v650 = vsel %vm648, %v636, 0
        %v653 = vsel %vm648, %v637, 0
        %v656 = vsel %vm648, %v638, 0
        %v659 = vsel %vm648, %v639, 0
        %v662 = vsel %vm648, %v640, 0
        %v665 = vsel %vm648, %v641, 0
        %v668 = vsel %vm648, %v642, 0
        %v671 = vsel %vm648, %v643, 0
        %673 = vmatprep.subr.bf16.mxu0 %v653
        %674 = vmatpush1.bf16.msra.mxu0 %v650
        %675 = vmatprep.subr.bf16.mxu0 0
        %676 = vmatpush1.bf16.msra.mxu0 0
        %677 = vmatprep.subr.bf16.mxu0 0
        %678 = vmatpush1.bf16.msra.mxu0 0
        %679 = vmatprep.subr.bf16.mxu0 0
        %680 = vmatpush1.bf16.msra.mxu0 0
        %681 = vmatprep.subr.bf16.mxu0 0
        %682 = vmatpush1.bf16.msra.mxu0 0
        %683 = vmatprep.subr.bf16.mxu0 0
        %684 = vmatpush1.bf16.msra.mxu0 0
        %685 = vmatprep.subr.bf16.mxu0 0
        %686 = vmatpush1.bf16.msra.mxu0 0
        %687 = vmatprep.subr.bf16.mxu0 0
        %688 = vmatpush1.bf16.msra.mxu0 0
        %689 = vmatprep.subr.bf16.mxu0 0
        %690 = vmatpush1.bf16.msra.mxu0 0
        %691 = vmatprep.subr.bf16.mxu0 0
        %692 = vmatpush1.bf16.msra.mxu0 0
        %693 = vmatprep.subr.bf16.mxu0 0
        %694 = vmatpush1.bf16.msra.mxu0 0
        %695 = vmatprep.subr.bf16.mxu0 0
        %696 = vmatpush1.bf16.msra.mxu0 0
        %697 = vmatprep.subr.bf16.mxu0 0
        %698 = vmatpush1.bf16.msra.mxu0 0
        %699 = vmatprep.subr.bf16.mxu0 0
        %700 = vmatpush1.bf16.msra.mxu0 0
        %701 = vmatprep.subr.bf16.mxu0 0
        %702 = vmatpush1.bf16.msra.mxu0 0
        %703 = vmatprep.subr.bf16.mxu0 0
        %704 = vmatpush1.bf16.msra.mxu0 0
        %705 = vmatprep.mubr.bf16.mxu0 0
        %706 = vmatmul.mubr.bf16.gmra.mrb[0].mxu0 %v646
        %v707 = vpop.f32.mrb[0].mxu0
        %v708 = vadd.f32 0.0, %v707
        %v709 = vpop.f32.mrb[0].mxu0
        %v710 = vadd.f32 0.0, %v709
        %v711 = vpop.f32.mrb[0].mxu0
        %v712 = vpop.f32.mrb[0].mxu0
        %713 = vdwg.mxu0
        %714 = vmatprep.subr.bf16.mxu0 %v659
        %715 = vmatpush1.bf16.msra.mxu0 %v656
        %716 = vmatprep.subr.bf16.mxu0 0
        %717 = vmatpush1.bf16.msra.mxu0 0
        %718 = vmatprep.subr.bf16.mxu0 0
        %719 = vmatpush1.bf16.msra.mxu0 0
        %720 = vmatprep.subr.bf16.mxu0 0
        %721 = vmatpush1.bf16.msra.mxu0 0
        %722 = vmatprep.subr.bf16.mxu0 0
        %723 = vmatpush1.bf16.msra.mxu0 0
        %724 = vmatprep.subr.bf16.mxu0 0
        %725 = vmatpush1.bf16.msra.mxu0 0
        %726 = vmatprep.subr.bf16.mxu0 0
        %727 = vmatpush1.bf16.msra.mxu0 0
        %728 = vmatprep.subr.bf16.mxu0 0
        %729 = vmatpush1.bf16.msra.mxu0 0
        %730 = vmatprep.subr.bf16.mxu0 0
        %731 = vmatpush1.bf16.msra.mxu0 0
        %732 = vmatprep.subr.bf16.mxu0 0
        %733 = vmatpush1.bf16.msra.mxu0 0
        %734 = vmatprep.subr.bf16.mxu0 0
        %735 = vmatpush1.bf16.msra.mxu0 0
        %736 = vmatprep.subr.bf16.mxu0 0
        %737 = vmatpush1.bf16.msra.mxu0 0
        %738 = vmatprep.subr.bf16.mxu0 0
        %739 = vmatpush1.bf16.msra.mxu0 0
        %740 = vmatprep.subr.bf16.mxu0 0
        %741 = vmatpush1.bf16.msra.mxu0 0
        %742 = vmatprep.subr.bf16.mxu0 0
        %743 = vmatpush1.bf16.msra.mxu0 0
        %744 = vmatprep.subr.bf16.mxu0 0
        %745 = vmatpush1.bf16.msra.mxu0 0
        %746 = vmatprep.mubr.bf16.mxu0 0
        %747 = vmatmul.mubr.bf16.gmra.mrb[0].mxu0 %v646
        %v748 = vpop.f32.mrb[0].mxu0
        %v749 = vadd.f32 0.0, %v748
        %v750 = vpop.f32.mrb[0].mxu0
        %v751 = vadd.f32 0.0, %v750
        %v752 = vpop.f32.mrb[0].mxu0
        %v753 = vpop.f32.mrb[0].mxu0
        %754 = vdwg.mxu0
        %755 = vmatprep.subr.bf16.mxu0 %v665
        %756 = vmatpush1.bf16.msra.mxu0 %v662
        %757 = vmatprep.subr.bf16.mxu0 0
        %758 = vmatpush1.bf16.msra.mxu0 0
        %759 = vmatprep.subr.bf16.mxu0 0
        %760 = vmatpush1.bf16.msra.mxu0 0
        %761 = vmatprep.subr.bf16.mxu0 0
        %762 = vmatpush1.bf16.msra.mxu0 0
        %763 = vmatprep.subr.bf16.mxu0 0
        %764 = vmatpush1.bf16.msra.mxu0 0
        %765 = vmatprep.subr.bf16.mxu0 0
        %766 = vmatpush1.bf16.msra.mxu0 0
        %767 = vmatprep.subr.bf16.mxu0 0
        %768 = vmatpush1.bf16.msra.mxu0 0
        %769 = vmatprep.subr.bf16.mxu0 0
        %770 = vmatpush1.bf16.msra.mxu0 0
        %771 = vmatprep.subr.bf16.mxu0 0
        %772 = vmatpush1.bf16.msra.mxu0 0
        %773 = vmatprep.subr.bf16.mxu0 0
        %774 = vmatpush1.bf16.msra.mxu0 0
        %775 = vmatprep.subr.bf16.mxu0 0
        %776 = vmatpush1.bf16.msra.mxu0 0
        %777 = vmatprep.subr.bf16.mxu0 0
        %778 = vmatpush1.bf16.msra.mxu0 0
        %779 = vmatprep.subr.bf16.mxu0 0
        %780 = vmatpush1.bf16.msra.mxu0 0
        %781 = vmatprep.subr.bf16.mxu0 0
        %782 = vmatpush1.bf16.msra.mxu0 0
        %783 = vmatprep.subr.bf16.mxu0 0
        %784 = vmatpush1.bf16.msra.mxu0 0
        %785 = vmatprep.subr.bf16.mxu0 0
        %786 = vmatpush1.bf16.msra.mxu0 0
        %787 = vmatprep.mubr.bf16.mxu0 0
        %788 = vmatmul.mubr.bf16.gmra.mrb[0].mxu0 %v646
        %v789 = vpop.f32.mrb[0].mxu0
        %v790 = vadd.f32 0.0, %v789
        %v791 = vpop.f32.mrb[0].mxu0
        %v792 = vadd.f32 0.0, %v791
        %v793 = vpop.f32.mrb[0].mxu0
        %v794 = vpop.f32.mrb[0].mxu0
        %795 = vdwg.mxu0
        %796 = vmatprep.subr.bf16.mxu0 %v671
        %797 = vmatpush1.bf16.msra.mxu0 %v668
        %798 = vmatprep.subr.bf16.mxu0 0
        %799 = vmatpush1.bf16.msra.mxu0 0
        %800 = vmatprep.subr.bf16.mxu0 0
        %801 = vmatpush1.bf16.msra.mxu0 0
        %802 = vmatprep.subr.bf16.mxu0 0
        %803 = vmatpush1.bf16.msra.mxu0 0
        %804 = vmatprep.subr.bf16.mxu0 0
        %805 = vmatpush1.bf16.msra.mxu0 0
        %806 = vmatprep.subr.bf16.mxu0 0
        %807 = vmatpush1.bf16.msra.mxu0 0
        %808 = vmatprep.subr.bf16.mxu0 0
        %809 = vmatpush1.bf16.msra.mxu0 0
        %810 = vmatprep.subr.bf16.mxu0 0
        %811 = vmatpush1.bf16.msra.mxu0 0
        %812 = vmatprep.subr.bf16.mxu0 0
        %813 = vmatpush1.bf16.msra.mxu0 0
        %814 = vmatprep.subr.bf16.mxu0 0
        %815 = vmatpush1.bf16.msra.mxu0 0
        %816 = vmatprep.subr.bf16.mxu0 0
        %817 = vmatpush1.bf16.msra.mxu0 0
        %818 = vmatprep.subr.bf16.mxu0 0
        %819 = vmatpush1.bf16.msra.mxu0 0
        %820 = vmatprep.subr.bf16.mxu0 0
        %821 = vmatpush1.bf16.msra.mxu0 0
        %822 = vmatprep.subr.bf16.mxu0 0
        %823 = vmatpush1.bf16.msra.mxu0 0
        %824 = vmatprep.subr.bf16.mxu0 0
        %825 = vmatpush1.bf16.msra.mxu0 0
        %826 = vmatprep.subr.bf16.mxu0 0
        %827 = vmatpush1.bf16.msra.mxu0 0
        %828 = vmatprep.mubr.bf16.mxu0 0
        %829 = vmatmul.mubr.bf16.gmra.mrb[0].mxu0 %v646
        %v830 = vpop.f32.mrb[0].mxu0
        %v831 = vadd.f32 0.0, %v830
        %v832 = vpop.f32.mrb[0].mxu0
        %v833 = vadd.f32 0.0, %v832
        %v834 = vpop.f32.mrb[0].mxu0
        %v835 = vpop.f32.mrb[0].mxu0
        %836 = vdwg.mxu0
        %837 = vst [vmem:[%s201] sm:$0xff] %v708
        %838 = vst [vmem:[%s201 + $0x8] sm:$0xff] %v710
        %839 = vst [vmem:[%s201 + $0x10] sm:$0xff] %v749
        %840 = vst [vmem:[%s201 + $0x18] sm:$0xff] %v751
        %841 = vst [vmem:[%s201 + $0x20] sm:$0xff] %v790
        %842 = vst [vmem:[%s201 + $0x28] sm:$0xff] %v792
        %843 = vst [vmem:[%s201 + $0x30] sm:$0xff] %v831
        %844 = vst [vmem:[%s201 + $0x38] sm:$0xff] %v833
        %s845 = sand.u32 %s97, 1
        %s846 = scalar_lea.sflag [#allocation4], %s845
        %s847 = sand.u32 %s97, 1
        %s848 = smul.addr %s847, 64
        %s849 = scalar_lea.vmem [#allocation7], %s848
        // Predicated region
        $region41: #{tpu_custom_call.1} parent=31 // pred_check
          %p850 = pneg %p107
        $region42: #{tpu_custom_call.1} parent=31 // pred_check_branch
          %852 = sbr.rel (%p850) target = $region44
        $region43: #{tpu_custom_call.1} parent=31 // pred_region
          %s854 = ssub.s32 1024, 1024
          %855 = vsyncadd %s846, %s854
          %s856 = smul.addr %s21, 8
          %s857 = smul.addr %s856, 128
          %s858 = scalar_lea.hbm %s3, %s857
          %s860 = sshll.u32 %s849, 4
          %s861 = int_to_ptr.vmem [resolvable:$true] %s860
          %863 = dma.vmem_to_hbm [thread:$0]  %s861, 1024, %s858, %s846
        $region44: #{tpu_custom_call.1} parent=31 // pred_fallthru
          _
      $region32: #{tpu_custom_call.1} parent=5 // pred_fallthru
        _
      %p864 = scmp.le.s32.totalorder 2, %s16
      // Predicated region
      $region45: #{tpu_custom_call.1} parent=5 // pred_check
        %p865 = pneg %p864
      $region46: #{tpu_custom_call.1} parent=5 // pred_check_branch
        %867 = sbr.rel (%p865) target = $region48
      $region47: #{tpu_custom_call.1} parent=5 // pred_region
        %s868 = ssub.s32 %s16, 2
        // Predicated region
        $region49: #{tpu_custom_call.1} parent=47 // pred_check
          %p869 = pneg %p113
        $region50: #{tpu_custom_call.1} parent=47 // pred_check_branch
          %871 = sbr.rel (%p869) target = $region52
        $region51: #{tpu_custom_call.1} parent=47 // pred_region
          %s872 = sand.u32 %s98, 1
          %s873 = scalar_lea.sflag [#allocation4], %s872
          %s874 = sand.u32 %s98, 1
          %s875 = smul.addr %s874, 64
          %s876 = scalar_lea.vmem [#allocation7], %s875
          %877 = dma.done %s873, 1024
        $region52: #{tpu_custom_call.1} parent=47 // pred_fallthru
          _
      $region48: #{tpu_custom_call.1} parent=5 // pred_fallthru
        _
    $region6: #{tpu_custom_call.1} parent=1 // loop_footer
      %s20 = sadd.s32 1, %s16
    $region7: #{tpu_custom_call.1} parent=1 // loop_footer_branch
      %15 = sbr.rel target = $region3
    $region8: #{tpu_custom_call.1} parent=1 // loop_exit
      _
    %878 = vsyncpa [#allocation3], 1
    %s879 = scalar_lea.sflag [#allocation3], 1
    %880 = vsyncpa %s879, 1
    %881 = vsyncpa [#allocation6], 1
    %882 = vsyncpa [#allocation4], 1
    %s883 = scalar_lea.sflag [#allocation4], 1
    %884 = vsyncpa %s883, 1

</llo_original>
